<compile_context>
chip_gen: v5e
topology: v5e:2x2
jax: 0.10.0
libtpu: 0.0.40
codegen_flags: <defaults>
</compile_context>

<pallas_src>
import functools

import jax
import jax.numpy as jnp
from jax import lax
from jax.experimental import pallas as pl
from jax.experimental.pallas import tpu as pltpu

_LANES = 128
# Above this many 128-lane chunks per grid step, switch the in-kernel chunk
# loop from a fully unrolled static Python loop to lax.fori_loop(unroll=4).
_STATIC_CHUNK_LOOP_MAX = 32


# ---------------------------------------------------------------------------
# Stage 1: streaming global avg/max pooling over the spatial axis.
# ---------------------------------------------------------------------------
def _pool_kernel(x_ref, avg_ref, max_ref, sum_sc, max_sc, *,
                 hw_total, thw, n_k, rem, need_mask):
    # x_ref   : (1, Cb, THW)  one (batch, channel-tile) slab, THW-tile of HW
    # avg_ref : (1, Cb, 1)    resident across the k axis, written at last k
    # max_ref : (1, Cb, 1)
    # sum_sc, max_sc : (Cb, 128) f32 running partials (persist across k)
    k = pl.program_id(2)

    @pl.when(k == 0)
    def _init():
        sum_sc[...] = jnp.zeros_like(sum_sc)
        max_sc[...] = jnp.full_like(max_sc, -jnp.inf)

    def accumulate(n_full, tail_lanes):
        # Load the accumulators once, keep them register-resident across the
        # whole chunk loop, write back once (avoids per-chunk vld/vst of the
        # accumulators -- the vst slot is the first to saturate on v5e).
        s = sum_sc[...]
        m = max_sc[...]

        if n_full > 0:
            if n_full <= _STATIC_CHUNK_LOOP_MAX:
                # Short tiles: fully static loop, static 128-lane slices.
                for j in range(n_full):
                    lo = j * _LANES
                    c = x_ref[0, :, lo:lo + _LANES].astype(jnp.float32)
                    s = s + c
                    m = jnp.maximum(m, c)
            else:
                # Long tiles: partially-unrolled fori_loop keeps LLO scheduler
                # visibility while bounding live ranges / code size.
                def body(j, carry):
                    sc, mc = carry
                    lo = pl.multiple_of(j * _LANES, _LANES)
                    c = x_ref[0, :, pl.ds(lo, _LANES)].astype(jnp.float32)
                    return sc + c, jnp.maximum(mc, c)

                s, m = lax.fori_loop(0, n_full, body, (s, m), unroll=4)

        if tail_lanes:
            # Single ragged chunk: mask padded lanes (0 for sum, -inf for max).
            lo = n_full * _LANES
            c = x_ref[0, :, lo:lo + _LANES].astype(jnp.float32)
            lane = lax.broadcasted_iota(jnp.int32, c.shape, 1)
            valid = lane < tail_lanes
            s = s + jnp.where(valid, c, 0.0)
            m = jnp.maximum(m, jnp.where(valid, c, -jnp.inf))

        sum_sc[...] = s
        max_sc[...] = m

    full_chunks = thw // _LANES          # chunks in a full (interior) HW tile
    tail_full_chunks = rem // _LANES     # full chunks in the last HW tile
    tail_lanes = rem % _LANES            # ragged lanes in the last HW tile

    if not need_mask:
        # HW is an exact multiple of THW: every tile is full, never mask.
        accumulate(full_chunks, 0)
    elif n_k == 1:
        # Single (ragged) tile.
        accumulate(tail_full_chunks, tail_lanes)
    else:
        # Interior tiles: pure unmasked add/max.  Last tile: mask only the
        # final ragged chunk.
        @pl.when(k < n_k - 1)
        def _interior():
            accumulate(full_chunks, 0)

        @pl.when(k == n_k - 1)
        def _last():
            accumulate(tail_full_chunks, tail_lanes)

    @pl.when(k == n_k - 1)
    def _finalize():
        inv_hw = 1.0 / hw_total
        avg = jnp.sum(sum_sc[...], axis=-1, keepdims=True) * inv_hw   # (Cb, 1)
        mx = jnp.max(max_sc[...], axis=-1, keepdims=True)             # (Cb, 1)
        avg_ref[0, :, :] = avg.astype(avg_ref.dtype)
        max_ref[0, :, :] = mx.astype(max_ref.dtype)


# ---------------------------------------------------------------------------
# Stage 2: shared MLP + sigmoid on a batch tile (lane-dense (Nb, C) output).
# ---------------------------------------------------------------------------
def _mlp_kernel(avg_ref, max_ref, w1t_ref, w2t_ref, o_ref):
    w1t = w1t_ref[...]                                   # (C, Cmid)
    h = (jnp.maximum(jnp.dot(avg_ref[...], w1t,
                             preferred_element_type=jnp.float32), 0.0)
         + jnp.maximum(jnp.dot(max_ref[...], w1t,
                               preferred_element_type=jnp.float32), 0.0))
    out = jnp.dot(h, w2t_ref[...], preferred_element_type=jnp.float32)  # (Nb, C)
    o_ref[...] = jax.nn.sigmoid(out).astype(o_ref.dtype)


# ---------------------------------------------------------------------------
# Tiling heuristics.
# ---------------------------------------------------------------------------
def _choose_c_tile(C):
    # Cap Cb at 128: chunk (16 vregs) + sum/max accumulators (32 vregs) stay
    # under the 64-vreg file, so the hot VPU loop never spills.  Cb must
    # divide C (or equal it) and be a multiple of 8 for clean tiling.
    if C <= 128:
        return C
    for t in (128, 64, 32, 16, 8):
        if C % t == 0:
            return t
    return C  # odd large C: single full-channel tile (rare, still correct)


def _choose_hw_tile(Cb, HW, dtype_bytes):
    # ~8 MiB input block per grid step (double-buffered by the pipeline =>
    # ~16 MiB of VMEM; fits v7x's 64 MiB/TC with headroom, and is large
    # enough to amortize the ~0.35 us per-grid-step overhead on all chips).
    budget = 8 * 1024 * 1024
    cap = max(_LANES, (budget // (dtype_bytes * Cb)) // _LANES * _LANES)
    hw_padded = pl.cdiv(HW, _LANES) * _LANES
    return min(cap, hw_padded)


@functools.partial(jax.jit, static_argnames=("hw_block_lanes",))
def channel_attention(x, w1, w2, *, hw_block_lanes=None):
    """x: (N, C, H, W); w1: (C//ratio, C); w2: (C, C//ratio). Returns (N, C, 1, 1)."""
    N, C, H, W = x.shape
    HW = H * W
    x_flat = x.reshape(N, C, HW)

    Cb = _choose_c_tile(C)
    dtype_bytes = jnp.dtype(x.dtype).itemsize
    if hw_block_lanes is None:
        THW = _choose_hw_tile(Cb, HW, dtype_bytes)
    else:  # explicit override (used by tests to force the multi-tile paths)
        THW = min(max(_LANES, (hw_block_lanes // _LANES) * _LANES),
                  pl.cdiv(HW, _LANES) * _LANES)

    n_c = pl.cdiv(C, Cb)
    n_k = pl.cdiv(HW, THW)
    rem = HW - (n_k - 1) * THW
    need_mask = (HW % THW) != 0

    pool_kernel = functools.partial(
        _pool_kernel, hw_total=HW, thw=THW, n_k=n_k, rem=rem,
        need_mask=need_mask)

    avg_nc1, max_nc1 = pl.pallas_call(
        pool_kernel,
        out_shape=(jax.ShapeDtypeStruct((N, C, 1), jnp.float32),
                   jax.ShapeDtypeStruct((N, C, 1), jnp.float32)),
        grid_spec=pltpu.PrefetchScalarGridSpec(
            num_scalar_prefetch=0,
            grid=(N, n_c, n_k),
            in_specs=[pl.BlockSpec((1, Cb, THW), lambda n, c, k: (n, c, k))],
            out_specs=[pl.BlockSpec((1, Cb, 1), lambda n, c, k: (n, c, 0)),
                       pl.BlockSpec((1, Cb, 1), lambda n, c, k: (n, c, 0))],
            scratch_shapes=[pltpu.VMEM((Cb, _LANES), jnp.float32),
                            pltpu.VMEM((Cb, _LANES), jnp.float32)],
        ),
        compiler_params=pltpu.CompilerParams(
            dimension_semantics=("parallel", "parallel", "arbitrary"),
            vmem_limit_bytes=48 * 1024 * 1024,
        ),
    )(x_flat)

    # Trailing-unit-dim reshapes are free (no strided-slice ops between stages).
    avg2d = avg_nc1.reshape(N, C)                  # (N, C) f32
    max2d = max_nc1.reshape(N, C)                  # (N, C) f32
    w1t = jnp.asarray(w1, jnp.float32).T           # (C, Cmid)
    w2t = jnp.asarray(w2, jnp.float32).T           # (Cmid, C)
    Cmid = w1.shape[0]

    Nb = N if N <= 256 else 256
    n_b = pl.cdiv(N, Nb)

    gate = pl.pallas_call(
        _mlp_kernel,
        out_shape=jax.ShapeDtypeStruct((N, C), x.dtype),
        grid_spec=pltpu.PrefetchScalarGridSpec(
            num_scalar_prefetch=0,
            grid=(n_b,),
            in_specs=[pl.BlockSpec((Nb, C), lambda i: (i, 0)),
                      pl.BlockSpec((Nb, C), lambda i: (i, 0)),
                      pl.BlockSpec((C, Cmid), lambda i: (0, 0)),
                      pl.BlockSpec((Cmid, C), lambda i: (0, 0))],
            out_specs=pl.BlockSpec((Nb, C), lambda i: (i, 0)),
        ),
        compiler_params=pltpu.CompilerParams(
            dimension_semantics=("arbitrary",),
            vmem_limit_bytes=32 * 1024 * 1024,
        ),
    )(avg2d, max2d, w1t, w2t)

    return gate.reshape(N, C, 1, 1)


# ---------------------------------------------------------------------------
# Reference + tests.
# ---------------------------------------------------------------------------
def _reference(x, w1, w2):
    avg = jnp.mean(x, axis=(2, 3))                 # (N, C)
    mx = jnp.max(x, axis=(2, 3))                   # (N, C)

    def mlp(v):
        h = jnp.maximum(v @ w1.T, 0.0)             # (N, Cmid)
        return h @ w2.T                            # (N, C)

    out = jax.nn.sigmoid(mlp(avg) + mlp(mx))
    return out[:, :, None, None]


def _run_case(key, N, C, H, W, ratio=16, hw_block_lanes=None):
    k_x, k_w1, k_w2 = jax.random.split(key, 3)
    Cmid = max(C // ratio, 1)
    x = jax.random.normal(k_x, (N, C, H, W), dtype=jnp.float32)
    w1 = jax.random.normal(k_w1, (Cmid, C), dtype=jnp.float32) * (1.0 / jnp.sqrt(C))
    w2 = jax.random.normal(k_w2, (C, Cmid), dtype=jnp.float32) * (1.0 / jnp.sqrt(Cmid))

    y = channel_attention(x, w1, w2, hw_block_lanes=hw_block_lanes)
    jax.block_until_ready(y)

    y_ref = _reference(x, w1, w2)
    assert y.shape == (N, C, 1, 1)
    err = jnp.max(jnp.abs(y - y_ref))
    assert jnp.allclose(y, y_ref, atol=1e-4, rtol=1e-4), f"max abs err {err}"


if __name__ == "__main__":
    key = jax.random.PRNGKey(0)
    keys = jax.random.split(key, 5)

    # main case: in_planes=32 -> hidden = 32 // 16 = 2, single full HW tile
    _run_case(keys[0], N=2, C=32, H=16, W=16)
    # ragged spatial size (HW not a multiple of 128): masked tail chunk
    _run_case(keys[1], N=2, C=32, H=9, W=9)
    # forced small HW tile: multi-step accumulation + interior/tail split
    _run_case(keys[2], N=2, C=32, H=33, W=33, hw_block_lanes=256)
    # long spatial axis: fori_loop chunk path + 1-lane masked tail
    _run_case(keys[3], N=2, C=64, H=65, W=65)
    # multiple channel tiles (C > 128 -> Cb = 128, n_c = 2)
    _run_case(keys[4], N=2, C=256, H=16, W=16)

    print("KERNEL_OK")
</pallas_src>

<mosaic_0001>
module attributes {stable_mosaic.version = 11 : i64} {
  func.func @_mlp_kernel(%arg0: i32, %arg1: memref<2x32xf32, #tpu.memory_space<vmem>>, %arg2: memref<2x32xf32, #tpu.memory_space<vmem>>, %arg3: memref<32x2xf32, #tpu.memory_space<vmem>>, %arg4: memref<2x32xf32, #tpu.memory_space<vmem>>, %arg5: memref<2x32xf32, #tpu.memory_space<vmem>>) attributes {dimension_semantics = [#tpu.dimension_semantics<arbitrary>], iteration_bounds = array<i64: 1>, scalar_prefetch = 0 : i64, scratch_operands = 0 : i64, tpu.core_type = #tpu.core_type<tc>, window_params = [{transform_indices = @transform_0, window_bounds = array<i64: 2, 32>}, {transform_indices = @transform_1, window_bounds = array<i64: 2, 32>}, {pipeline_mode = #tpu.pipeline_mode<synchronous>, transform_indices = @transform_2, window_bounds = array<i64: 32, 2>}, {pipeline_mode = #tpu.pipeline_mode<synchronous>, transform_indices = @transform_3, window_bounds = array<i64: 2, 32>}, {transform_indices = @transform_4, window_bounds = array<i64: 2, 32>}]} {
    %c0 = arith.constant 0 : index
    %c0_0 = arith.constant 0 : index
    %0 = vector.load %arg3[%c0, %c0_0] : memref<32x2xf32, #tpu.memory_space<vmem>>, vector<32x2xf32>
    %c0_1 = arith.constant 0 : index
    %c0_2 = arith.constant 0 : index
    %1 = vector.load %arg1[%c0_1, %c0_2] : memref<2x32xf32, #tpu.memory_space<vmem>>, vector<2x32xf32>
    %cst = arith.constant dense<0.000000e+00> : vector<2x2xf32>
    %2 = tpu.matmul %1, %0, %cst {dimension_numbers = #tpu.dot_dimension_numbers<[1], [0], [0], [1], [0, 0, 1, 1], [], []>} : vector<2x32xf32>, vector<32x2xf32>, vector<2x2xf32> -> vector<2x2xf32>
    %cst_3 = arith.constant 0.000000e+00 : f32
    %3 = vector.broadcast %cst_3 : f32 to vector<2x2xf32>
    %4 = arith.maximumf %2, %3 : vector<2x2xf32>
    %c0_4 = arith.constant 0 : index
    %c0_5 = arith.constant 0 : index
    %5 = vector.load %arg2[%c0_4, %c0_5] : memref<2x32xf32, #tpu.memory_space<vmem>>, vector<2x32xf32>
    %cst_6 = arith.constant dense<0.000000e+00> : vector<2x2xf32>
    %6 = tpu.matmul %5, %0, %cst_6 {dimension_numbers = #tpu.dot_dimension_numbers<[1], [0], [0], [1], [0, 0, 1, 1], [], []>} : vector<2x32xf32>, vector<32x2xf32>, vector<2x2xf32> -> vector<2x2xf32>
    %cst_7 = arith.constant 0.000000e+00 : f32
    %7 = vector.broadcast %cst_7 : f32 to vector<2x2xf32>
    %8 = arith.maximumf %6, %7 : vector<2x2xf32>
    %9 = arith.addf %4, %8 : vector<2x2xf32>
    %c0_8 = arith.constant 0 : index
    %c0_9 = arith.constant 0 : index
    %10 = vector.load %arg4[%c0_8, %c0_9] : memref<2x32xf32, #tpu.memory_space<vmem>>, vector<2x32xf32>
    %cst_10 = arith.constant dense<0.000000e+00> : vector<2x32xf32>
    %11 = tpu.matmul %9, %10, %cst_10 {dimension_numbers = #tpu.dot_dimension_numbers<[1], [0], [0], [1], [0, 0, 1, 1], [], []>} : vector<2x2xf32>, vector<2x32xf32>, vector<2x32xf32> -> vector<2x32xf32>
    %12 = arith.negf %11 : vector<2x32xf32>
    %13 = math.exp %12 : vector<2x32xf32>
    %cst_11 = arith.constant 1.000000e+00 : f32
    %14 = vector.broadcast %cst_11 : f32 to vector<2x32xf32>
    %15 = arith.addf %14, %13 : vector<2x32xf32>
    %16 = arith.divf %14, %15 : vector<2x32xf32>
    %c0_12 = arith.constant 0 : index
    %c0_13 = arith.constant 0 : index
    %17 = vector.load %arg5[%c0_12, %c0_13] : memref<2x32xf32, #tpu.memory_space<vmem>>, vector<2x32xf32>
    tpu.vector_store %arg5[%c0_12, %c0_13], %16 {strides = array<i32>} : memref<2x32xf32, #tpu.memory_space<vmem>>, vector<2x32xf32>,
    return
  }
  func.func @transform_0(%arg0: i32) -> (i32, i32) {
    %c0_i32 = arith.constant 0 : i32
    %c0_i32_0 = arith.constant 0 : i32
    return %arg0, %c0_i32 : i32, i32
  }
  func.func @transform_1(%arg0: i32) -> (i32, i32) {
    %c0_i32 = arith.constant 0 : i32
    %c0_i32_0 = arith.constant 0 : i32
    return %arg0, %c0_i32 : i32, i32
  }
  func.func @transform_2(%arg0: i32) -> (i32, i32) {
    %c0_i32 = arith.constant 0 : i32
    %c0_i32_0 = arith.constant 0 : i32
    %c0_i32_1 = arith.constant 0 : i32
    return %c0_i32, %c0_i32_0 : i32, i32
  }
  func.func @transform_3(%arg0: i32) -> (i32, i32) {
    %c0_i32 = arith.constant 0 : i32
    %c0_i32_0 = arith.constant 0 : i32
    %c0_i32_1 = arith.constant 0 : i32
    return %c0_i32, %c0_i32_0 : i32, i32
  }
  func.func @transform_4(%arg0: i32) -> (i32, i32) {
    %c0_i32 = arith.constant 0 : i32
    %c0_i32_0 = arith.constant 0 : i32
    return %arg0, %c0_i32 : i32, i32
  }
}

module attributes {stable_mosaic.version = 11 : i64} {
  func.func @_pool_kernel(%arg0: i32, %arg1: i32, %arg2: i32, %arg3: memref<1x32x256xf32, #tpu.memory_space<vmem>>, %arg4: memref<1x32x1xf32, #tpu.memory_space<vmem>>, %arg5: memref<1x32x1xf32, #tpu.memory_space<vmem>>, %arg6: memref<32x128xf32, #tpu.memory_space<vmem>>, %arg7: memref<32x128xf32, #tpu.memory_space<vmem>>) attributes {dimension_semantics = [#tpu.dimension_semantics<parallel>, #tpu.dimension_semantics<parallel>, #tpu.dimension_semantics<arbitrary>], iteration_bounds = array<i64: 2, 1, 1>, scalar_prefetch = 0 : i64, scratch_operands = 2 : i64, tpu.core_type = #tpu.core_type<tc>, window_params = [{transform_indices = @transform_0, window_bounds = array<i64: 1, 32, 256>}, {transform_indices = @transform_1, window_bounds = array<i64: 1, 32, 1>}, {transform_indices = @transform_2, window_bounds = array<i64: 1, 32, 1>}]} {
    %c0_i32 = arith.constant 0 : i32
    %0 = arith.cmpi eq, %arg2, %c0_i32 : i32
    %1 = arith.extui %0 : i1 to i32
    %c0_i32_0 = arith.constant 0 : i32
    %2 = arith.cmpi ne, %1, %c0_i32_0 : i32
    scf.if %2 {
      %cst = arith.constant 0.000000e+00 : f32
      %18 = vector.broadcast %cst : f32 to vector<32x128xf32>
      %c0_15 = arith.constant 0 : index
      %c0_16 = arith.constant 0 : index
      %19 = vector.load %arg6[%c0_15, %c0_16] : memref<32x128xf32, #tpu.memory_space<vmem>>, vector<32x128xf32>
      tpu.vector_store %arg6[%c0_15, %c0_16], %18 {strides = array<i32>} : memref<32x128xf32, #tpu.memory_space<vmem>>, vector<32x128xf32>,
      %cst_17 = arith.constant 0xFF800000 : f32
      %20 = vector.broadcast %cst_17 : f32 to vector<32x128xf32>
      %c0_18 = arith.constant 0 : index
      %c0_19 = arith.constant 0 : index
      %21 = vector.load %arg7[%c0_18, %c0_19] : memref<32x128xf32, #tpu.memory_space<vmem>>, vector<32x128xf32>
      tpu.vector_store %arg7[%c0_18, %c0_19], %20 {strides = array<i32>} : memref<32x128xf32, #tpu.memory_space<vmem>>, vector<32x128xf32>,
    } else {
    }
    %c0 = arith.constant 0 : index
    %c0_1 = arith.constant 0 : index
    %3 = vector.load %arg6[%c0, %c0_1] : memref<32x128xf32, #tpu.memory_space<vmem>>, vector<32x128xf32>
    %c0_2 = arith.constant 0 : index
    %c0_3 = arith.constant 0 : index
    %4 = vector.load %arg7[%c0_2, %c0_3] : memref<32x128xf32, #tpu.memory_space<vmem>>, vector<32x128xf32>
    %c0_4 = arith.constant 0 : index
    %c0_5 = arith.constant 0 : index
    %c0_6 = arith.constant 0 : index
    %5 = vector.load %arg3[%c0_4, %c0_5, %c0_6] : memref<1x32x256xf32, #tpu.memory_space<vmem>>, vector<1x32x128xf32>
    %6 = vector.shape_cast %5 : vector<1x32x128xf32> to vector<32x128xf32>
    %7 = arith.addf %3, %6 : vector<32x128xf32>
    %8 = arith.maximumf %4, %6 : vector<32x128xf32>
    %c0_7 = arith.constant 0 : index
    %c0_8 = arith.constant 0 : index
    %c128 = arith.constant 128 : index
    %9 = vector.load %arg3[%c0_7, %c0_8, %c128] : memref<1x32x256xf32, #tpu.memory_space<vmem>>, vector<1x32x128xf32>
    %10 = vector.shape_cast %9 : vector<1x32x128xf32> to vector<32x128xf32>
    %11 = arith.addf %7, %10 : vector<32x128xf32>
    %12 = arith.maximumf %8, %10 : vector<32x128xf32>
    %c0_9 = arith.constant 0 : index
    %c0_10 = arith.constant 0 : index
    %13 = vector.load %arg6[%c0_9, %c0_10] : memref<32x128xf32, #tpu.memory_space<vmem>>, vector<32x128xf32>
    tpu.vector_store %arg6[%c0_9, %c0_10], %11 {strides = array<i32>} : memref<32x128xf32, #tpu.memory_space<vmem>>, vector<32x128xf32>,
    %c0_11 = arith.constant 0 : index
    %c0_12 = arith.constant 0 : index
    %14 = vector.load %arg7[%c0_11, %c0_12] : memref<32x128xf32, #tpu.memory_space<vmem>>, vector<32x128xf32>
    tpu.vector_store %arg7[%c0_11, %c0_12], %12 {strides = array<i32>} : memref<32x128xf32, #tpu.memory_space<vmem>>, vector<32x128xf32>,
    %c0_i32_13 = arith.constant 0 : i32
    %15 = arith.cmpi eq, %arg2, %c0_i32_13 : i32
    %16 = arith.extui %15 : i1 to i32
    %c0_i32_14 = arith.constant 0 : i32
    %17 = arith.cmpi ne, %16, %c0_i32_14 : i32
    scf.if %17 {
      %c0_15 = arith.constant 0 : index
      %c0_16 = arith.constant 0 : index
      %18 = vector.load %arg6[%c0_15, %c0_16] : memref<32x128xf32, #tpu.memory_space<vmem>>, vector<32x128xf32>
      %cst = arith.constant dense<0.000000e+00> : vector<32xf32>
      %19 = vector.multi_reduction <add>, %18, %cst [1] : vector<32x128xf32> to vector<32xf32>
      %20 = vector.shape_cast %19 : vector<32xf32> to vector<32x1xf32>
      %cst_17 = arith.constant 3.906250e-03 : f32
      %21 = vector.broadcast %cst_17 : f32 to vector<32x1xf32>
      %22 = arith.mulf %20, %21 : vector<32x1xf32>
      %c0_18 = arith.constant 0 : index
      %c0_19 = arith.constant 0 : index
      %23 = vector.load %arg7[%c0_18, %c0_19] : memref<32x128xf32, #tpu.memory_space<vmem>>, vector<32x128xf32>
      %cst_20 = arith.constant dense<0xFF800000> : vector<32xf32>
      %24 = vector.multi_reduction <maximumf>, %23, %cst_20 [1] : vector<32x128xf32> to vector<32xf32>
      %25 = vector.shape_cast %24 : vector<32xf32> to vector<32x1xf32>
      %c0_21 = arith.constant 0 : index
      %c0_22 = arith.constant 0 : index
      %c0_23 = arith.constant 0 : index
      %26 = vector.load %arg4[%c0_21, %c0_22, %c0_23] : memref<1x32x1xf32, #tpu.memory_space<vmem>>, vector<1x32x1xf32>
      %27 = vector.shape_cast %26 : vector<1x32x1xf32> to vector<32x1xf32>
      %28 = vector.shape_cast %22 : vector<32x1xf32> to vector<1x32x1xf32>
      tpu.vector_store %arg4[%c0_21, %c0_22, %c0_23], %28 {strides = array<i32>} : memref<1x32x1xf32, #tpu.memory_space<vmem>>, vector<1x32x1xf32>,
      %c0_24 = arith.constant 0 : index
      %c0_25 = arith.constant 0 : index
      %c0_26 = arith.constant 0 : index
      %29 = vector.load %arg5[%c0_24, %c0_25, %c0_26] : memref<1x32x1xf32, #tpu.memory_space<vmem>>, vector<1x32x1xf32>
      %30 = vector.shape_cast %29 : vector<1x32x1xf32> to vector<32x1xf32>
      %31 = vector.shape_cast %25 : vector<32x1xf32> to vector<1x32x1xf32>
      tpu.vector_store %arg5[%c0_24, %c0_25, %c0_26], %31 {strides = array<i32>} : memref<1x32x1xf32, #tpu.memory_space<vmem>>, vector<1x32x1xf32>,
    } else {
    }
    return
  }
  func.func @transform_0(%arg0: i32, %arg1: i32, %arg2: i32) -> (i32, i32, i32) {
    %c0_i32 = arith.constant 0 : i32
    return %arg0, %arg1, %arg2 : i32, i32, i32
  }
  func.func @transform_1(%arg0: i32, %arg1: i32, %arg2: i32) -> (i32, i32, i32) {
    %c0_i32 = arith.constant 0 : i32
    %c0_i32_0 = arith.constant 0 : i32
    return %arg0, %arg1, %c0_i32 : i32, i32, i32
  }
  func.func @transform_2(%arg0: i32, %arg1: i32, %arg2: i32) -> (i32, i32, i32) {
    %c0_i32 = arith.constant 0 : i32
    %c0_i32_0 = arith.constant 0 : i32
    return %arg0, %arg1, %c0_i32 : i32, i32, i32
  }
}

</mosaic_0001>

<llo_original>
// kernel: channel_attention.2
$region0: #{channel_attention.2}
  #allocation0 [shape = 'u32[]', space=smem, size = 0x4, offset = 0x4, fixed_abs, tag = 'smem constant byte address 0x4 - core index']
  #allocation1 [shape = 'u32[72,128]{1,0:T(1,128)}', space=vmem, size = 0x9000, scoped, tag = 'internal scratch']
  #allocation2 [shape = 'f32[32,128]{1,0:T(8,128)}', space=vmem, size = 0x4000, scoped, tag = 'scratch operand']
  #allocation3 [shape = 'f32[32,128]{1,0:T(8,128)}', space=vmem, size = 0x4000, scoped, tag = 'scratch operand']
  %s0 = inlined_call_operand.vmem [shape: f32[2,32,256], index: 0, kind: input, shape index: {}]
  %s1 = inlined_call_operand.vmem [shape: f32[2,32,1], index: 1, kind: output, shape index: {0}]
  %s2 = inlined_call_operand.vmem [shape: f32[2,32,1], index: 2, kind: output, shape index: {1}]
  %3 = xla_tuple %s1, %s2
  %s4 = sld [smem:[#allocation0]]
  $region53: #{channel_attention.2} parent=0
    _
  %s6 = ssub.s32 1, %s4
  %s7 = scalar_select 0, %s6, %s4
  loop: start=0, step=1, limit=4
  $region2: #{channel_attention.2} parent=0 // loop_pre_header
    _
  $region3: #{channel_attention.2} parent=0 // loop_header
    %s9 = sphi 0, %s13
    %p10 = scmp.ge.s32.totalorder %s9, 4
    %s16 = sphi 0, %s35
    %s17 = sphi 0, %s31
    %s18 = sphi 0, %s27
    %s19 = sphi 0, %s16
    %s20 = sphi 0, %s17
    %s21 = sphi 0, %s18
    %s22 = sphi 0, %s19
    %s23 = sphi 0, %s20
    %s24 = sphi 0, %s21
    %s42 = sphi 0, %s44
    %s45 = sphi 0, %s42
    %s46 = sphi 0, %s45
    %s62 = sphi 0, %s46
    %s70 = sphi 0, %s72
    %s73 = sphi 0, %s70
    %s74 = sphi 0, %s73
    %s90 = sphi 0, %s74
    %s98 = sphi 0, %s100
    %s101 = sphi 0, %s98
    %s102 = sphi 0, %s101
    %s118 = sphi 0, %s102
  $region4: #{channel_attention.2} parent=0 // loop_header_branch
    %12 = sbr.rel (%p10) target = $region8
  $region5: #{channel_attention.2} parent=0 // loop_body
    %s14 = ssub.s32 %s9, 1
    %s15 = ssub.s32 %s9, 2
    %s25 = sadd.s32 1, %s18
    %p26 = scmp.ge.s32.totalorder %s25, 1
    %s27 = scalar_select %p26, 0, %s25
    %s28 = sadd.s32 1, %s17
    %s29 = scalar_select %p26, %s28, %s17
    %p30 = scmp.ge.s32.totalorder %s29, 1
    %s31 = scalar_select %p30, 0, %s29
    %s32 = sadd.s32 1, %s16
    %s33 = scalar_select %p30, %s32, %s16
    %p34 = scmp.ge.s32.totalorder %s33, 2
    %s35 = scalar_select %p34, 0, %s33
    %s36 = ssub.s32 %s16, %s35
    %s37 = ssub.s32 %s17, %s31
    %s38 = sor.u32 %s36, %s37
    %s39 = ssub.s32 %s18, %s27
    %s40 = sor.u32 %s38, %s39
    %p41 = scmp.eq.s32.totalorder %s40, 0
    %s43 = sadd.s32 %s42, 1
    %s44 = scalar_select %p41, %s42, %s43
    %p47 = pneg %p41
    %p48 = scmp.eq.s32.totalorder %s9, 1
    %p49 = por %p47, %p48
    %p50 = scmp.ne.s32.totalorder %s42, %s45
    %p51 = scmp.eq.s32.totalorder %s9, 0
    %p52 = por %p50, %p51
    %p53 = scmp.ne.s32.totalorder %s42, %s45
    %p54 = scmp.eq.s32.totalorder %s14, 1
    %p55 = por %p53, %p54
    %p56 = scmp.ne.s32.totalorder %s45, %s46
    %p57 = scmp.eq.s32.totalorder %s14, 0
    %p58 = por %p56, %p57
    %p59 = scmp.ne.s32.totalorder %s45, %s46
    %p60 = scmp.eq.s32.totalorder %s15, 1
    %p61 = por %p59, %p60
    %p63 = scmp.ne.s32.totalorder %s46, %s62
    %p64 = scmp.eq.s32.totalorder %s15, 0
    %p65 = por %p63, %p64
    %s66 = ssub.s32 %s16, %s35
    %s67 = ssub.s32 %s17, %s31
    %s68 = sor.u32 %s66, %s67
    %p69 = scmp.eq.s32.totalorder %s68, 0
    %s71 = sadd.s32 %s70, 1
    %s72 = scalar_select %p69, %s70, %s71
    %p75 = pneg %p69
    %p76 = scmp.eq.s32.totalorder %s9, 1
    %p77 = por %p75, %p76
    %p78 = scmp.ne.s32.totalorder %s70, %s73
    %p79 = scmp.eq.s32.totalorder %s9, 0
    %p80 = por %p78, %p79
    %p81 = scmp.ne.s32.totalorder %s70, %s73
    %p82 = scmp.eq.s32.totalorder %s14, 1
    %p83 = por %p81, %p82
    %p84 = scmp.ne.s32.totalorder %s73, %s74
    %p85 = scmp.eq.s32.totalorder %s14, 0
    %p86 = por %p84, %p85
    %p87 = scmp.ne.s32.totalorder %s73, %s74
    %p88 = scmp.eq.s32.totalorder %s15, 1
    %p89 = por %p87, %p88
    %p91 = scmp.ne.s32.totalorder %s74, %s90
    %p92 = scmp.eq.s32.totalorder %s15, 0
    %p93 = por %p91, %p92
    %s94 = ssub.s32 %s16, %s35
    %s95 = ssub.s32 %s17, %s31
    %s96 = sor.u32 %s94, %s95
    %p97 = scmp.eq.s32.totalorder %s96, 0
    %s99 = sadd.s32 %s98, 1
    %s100 = scalar_select %p97, %s98, %s99
    %p103 = pneg %p97
    %p104 = scmp.eq.s32.totalorder %s9, 1
    %p105 = por %p103, %p104
    %p106 = scmp.ne.s32.totalorder %s98, %s101
    %p107 = scmp.eq.s32.totalorder %s9, 0
    %p108 = por %p106, %p107
    %p109 = scmp.ne.s32.totalorder %s98, %s101
    %p110 = scmp.eq.s32.totalorder %s14, 1
    %p111 = por %p109, %p110
    %p112 = scmp.ne.s32.totalorder %s101, %s102
    %p113 = scmp.eq.s32.totalorder %s14, 0
    %p114 = por %p112, %p113
    %p115 = scmp.ne.s32.totalorder %s101, %s102
    %p116 = scmp.eq.s32.totalorder %s15, 1
    %p117 = por %p115, %p116
    %p119 = scmp.ne.s32.totalorder %s102, %s118
    %p120 = scmp.eq.s32.totalorder %s15, 0
    %p121 = por %p119, %p120
    %p122 = scmp.le.s32.totalorder 1, %s9
    %p123 = scmp.lt.s32.totalorder %s9, 3
    %p124 = pnand %p122, %p123
    %p125 = pneg %p124
    // Predicated region
    $region9: #{channel_attention.2} parent=5 // pred_check
      _
    $region10: #{channel_attention.2} parent=5 // pred_check_branch
      %127 = sbr.rel (%p124) target = $region12
    $region11: #{channel_attention.2} parent=5 // pred_region
      %s128 = ssub.s32 %s9, 1
    $region12: #{channel_attention.2} parent=5 // pred_fallthru
      _
    %p129 = scmp.lt.s32.totalorder %s9, 2
    // Predicated region
    $region13: #{channel_attention.2} parent=5 // pred_check
      %p130 = pneg %p129
    $region14: #{channel_attention.2} parent=5 // pred_check_branch
      %132 = sbr.rel (%p130) target = $region16
    $region15: #{channel_attention.2} parent=5 // pred_region
      // Predicated region
      $region17: #{channel_attention.2} parent=15 // pred_check
        %p133 = pneg %p52
      $region18: #{channel_attention.2} parent=15 // pred_check_branch
        %135 = sbr.rel (%p133) target = $region20
      $region19: #{channel_attention.2} parent=15 // pred_region
        %s136 = smul.u32 4, %s17
        %s137 = smul.u32 2, %s18
        %p138 = scmp.lt.s32.totalorder %s16, 1
        %s139 = scalar_select %p138, %s16, 1
        %p140 = scmp.lt.s32.totalorder %s136, 3
        %s141 = scalar_select %p140, %s136, 3
        %p142 = scmp.lt.s32.totalorder %s137, 1
        %s143 = scalar_select %p142, %s137, 1
        %s144 = smul.addr %s141, 2
        %s145 = sadd.s32 %s143, %s144
        %s146 = smul.addr %s139, 8
        %s147 = sadd.s32 %s145, %s146
        %s148 = smul.addr %s147, 8
        %s149 = scalar_lea.vmem %s0, %s148
        %s150 = smul.u32 4, %s17
        %s151 = smul.u32 2, %s18
      $region20: #{channel_attention.2} parent=15 // pred_fallthru
        _
    $region16: #{channel_attention.2} parent=5 // pred_fallthru
      _
    %p152 = scmp.le.s32.totalorder 1, %s9
    %p153 = scmp.lt.s32.totalorder %s9, 3
    %p154 = pnand %p152, %p153
    %p155 = pneg %p154
    // Predicated region
    $region21: #{channel_attention.2} parent=5 // pred_check
      _
    $region22: #{channel_attention.2} parent=5 // pred_check_branch
      %157 = sbr.rel (%p154) target = $region24
    $region23: #{channel_attention.2} parent=5 // pred_region
      %s158 = ssub.s32 %s9, 1
      %s159 = smul.u32 4, %s20
      %s160 = smul.u32 2, %s21
      %p161 = scmp.lt.s32.totalorder %s19, 1
      %s162 = scalar_select %p161, %s19, 1
      %p163 = scmp.lt.s32.totalorder %s159, 3
      %s164 = scalar_select %p163, %s159, 3
      %p165 = scmp.lt.s32.totalorder %s160, 1
      %s166 = scalar_select %p165, %s160, 1
      %s167 = smul.addr %s164, 2
      %s168 = sadd.s32 %s166, %s167
      %s169 = smul.addr %s162, 8
      %s170 = sadd.s32 %s168, %s169
      %s171 = smul.addr %s170, 8
      %s172 = scalar_lea.vmem %s0, %s171
      %p173 = pneg %p58
      %p174 = pneg %p55
      %p175 = pneg %p86
      %p176 = pneg %p83
      %s177 = smul.u32 4, %s20
      %p178 = scmp.lt.s32.totalorder %s19, 1
      %s179 = scalar_select %p178, %s19, 1
      %p180 = scmp.lt.s32.totalorder %s177, 3
      %s181 = scalar_select %p180, %s177, 3
      %s182 = smul.addr %s179, 4
      %s183 = sadd.s32 %s181, %s182
      %s184 = smul.addr %s183, 8
      %s185 = scalar_lea.vmem %s1, %s184
      %p186 = pneg %p114
      %p187 = pneg %p111
      %s188 = smul.u32 4, %s20
      %p189 = scmp.lt.s32.totalorder %s19, 1
      %s190 = scalar_select %p189, %s19, 1
      %p191 = scmp.lt.s32.totalorder %s188, 3
      %s192 = scalar_select %p191, %s188, 3
      %s193 = smul.addr %s190, 4
      %s194 = sadd.s32 %s192, %s193
      %s195 = smul.addr %s194, 8
      %s196 = scalar_lea.vmem %s2, %s195
      %s197 = smul.u32 4, %s20
      %s198 = smul.u32 2, %s21
      %p199 = scmp.lt.s32.totalorder %s19, 1
      %s200 = scalar_select %p199, %s19, 1
      %p201 = scmp.lt.s32.totalorder %s197, 3
      %s202 = scalar_select %p201, %s197, 3
      %p203 = scmp.lt.s32.totalorder %s198, 1
      %s204 = scalar_select %p203, %s198, 1
      %s205 = smul.addr %s202, 2
      %s206 = sadd.s32 %s204, %s205
      %s207 = smul.addr %s200, 8
      %s208 = sadd.s32 %s206, %s207
      %s209 = smul.addr %s208, 8
      %s210 = scalar_lea.vmem %s0, %s209
      %s211 = smul.u32 4, %s20
      %s212 = smul.u32 2, %s21
      %s213 = smul.u32 4, %s20
      %p214 = scmp.lt.s32.totalorder %s19, 1
      %s215 = scalar_select %p214, %s19, 1
      %p216 = scmp.lt.s32.totalorder %s213, 3
      %s217 = scalar_select %p216, %s213, 3
      %s218 = smul.addr %s215, 4
      %s219 = sadd.s32 %s217, %s218
      %s220 = smul.addr %s219, 8
      %s221 = scalar_lea.vmem %s1, %s220
      %s222 = smul.u32 4, %s20
      %s223 = smul.u32 4, %s20
      %p224 = scmp.lt.s32.totalorder %s19, 1
      %s225 = scalar_select %p224, %s19, 1
      %p226 = scmp.lt.s32.totalorder %s223, 3
      %s227 = scalar_select %p226, %s223, 3
      %s228 = smul.addr %s225, 4
      %s229 = sadd.s32 %s227, %s228
      %s230 = smul.addr %s229, 8
      %s231 = scalar_lea.vmem %s2, %s230
      %s232 = smul.u32 4, %s20
      %p233 = scmp.eq.s32.totalorder %s21, 0
      // Predicated region
      $region25: #{channel_attention.2} parent=23 // pred_check
        %p234 = pneg %p233
      $region26: #{channel_attention.2} parent=23 // pred_check_branch
        %236 = sbr.rel (%p234) target = $region28
      $region27: #{channel_attention.2} parent=23 // pred_region
        %237 = vst [vmem:[#allocation2] sm:$0xff] 0.0
        %238 = vst [vmem:[#allocation2 + $0x8] sm:$0xff] 0.0
        %239 = vst [vmem:[#allocation2 + $0x10] sm:$0xff] 0.0
        %240 = vst [vmem:[#allocation2 + $0x18] sm:$0xff] 0.0
        %241 = vst [vmem:[#allocation3] sm:$0xff] -inf
        %242 = vst [vmem:[#allocation3 + $0x8] sm:$0xff] -inf
        %243 = vst [vmem:[#allocation3 + $0x10] sm:$0xff] -inf
        %244 = vst [vmem:[#allocation3 + $0x18] sm:$0xff] -inf
      $region28: #{channel_attention.2} parent=23 // pred_fallthru
        _
      %v245 = vld [vmem:[#allocation2] sm:$0xff]
      %v246 = vld [vmem:[#allocation2 + $0x8] sm:$0xff]
      %v247 = vld [vmem:[#allocation2 + $0x10] sm:$0xff]
      %v248 = vld [vmem:[#allocation2 + $0x18] sm:$0xff]
      %v249 = vld [vmem:[#allocation3] sm:$0xff]
      %v250 = vld [vmem:[#allocation3 + $0x8] sm:$0xff]
      %v251 = vld [vmem:[#allocation3 + $0x10] sm:$0xff]
      %v252 = vld [vmem:[#allocation3 + $0x18] sm:$0xff]
      %v253 = vld [vmem:[%s210] sm:$0xff]
      %v254 = vld [vmem:[%s210 + $0x10] sm:$0xff]
      %v255 = vld [vmem:[%s210 + $0x20] sm:$0xff]
      %v256 = vld [vmem:[%s210 + $0x30] sm:$0xff]
      %v257 = vadd.f32 %v245, %v253
      %v258 = vadd.f32 %v246, %v254
      %v259 = vadd.f32 %v247, %v255
      %v260 = vadd.f32 %v248, %v256
      %v261 = vmax.f32 %v249, %v253
      %v262 = vmax.f32 %v250, %v254
      %v263 = vmax.f32 %v251, %v255
      %v264 = vmax.f32 %v252, %v256
      %v265 = vld [vmem:[%s210 + $0x8] sm:$0xff]
      %v266 = vld [vmem:[%s210 + $0x18] sm:$0xff]
      %v267 = vld [vmem:[%s210 + $0x28] sm:$0xff]
      %v268 = vld [vmem:[%s210 + $0x38] sm:$0xff]
      %v269 = vadd.f32 %v257, %v265
      %v270 = vadd.f32 %v258, %v266
      %v271 = vadd.f32 %v259, %v267
      %v272 = vadd.f32 %v260, %v268
      %v273 = vmax.f32 %v261, %v265
      %v274 = vmax.f32 %v262, %v266
      %v275 = vmax.f32 %v263, %v267
      %v276 = vmax.f32 %v264, %v268
      %277 = vst [vmem:[#allocation2] sm:$0xff] %v269
      %278 = vst [vmem:[#allocation2 + $0x8] sm:$0xff] %v270
      %279 = vst [vmem:[#allocation2 + $0x10] sm:$0xff] %v271
      %280 = vst [vmem:[#allocation2 + $0x18] sm:$0xff] %v272
      %281 = vst [vmem:[#allocation3] sm:$0xff] %v273
      %282 = vst [vmem:[#allocation3 + $0x8] sm:$0xff] %v274
      %283 = vst [vmem:[#allocation3 + $0x10] sm:$0xff] %v275
      %284 = vst [vmem:[#allocation3 + $0x18] sm:$0xff] %v276
      // Predicated region
      $region29: #{channel_attention.2} parent=23 // pred_check
        %p285 = pneg %p233
      $region30: #{channel_attention.2} parent=23 // pred_check_branch
        %287 = sbr.rel (%p285) target = $region32
      $region31: #{channel_attention.2} parent=23 // pred_region
        %v288 = vld [vmem:[#allocation2] sm:$0xff]
        %v289 = vld [vmem:[#allocation2 + $0x8] sm:$0xff]
        %v290 = vld [vmem:[#allocation2 + $0x10] sm:$0xff]
        %v291 = vld [vmem:[#allocation2 + $0x18] sm:$0xff]
        %292 = vadd.xlane.f32.xlu0 %v288
        %v293 = vpop.xlane.xlu0 %292
        %294 = vadd.xlane.f32.xlu0 %v289
        %v295 = vpop.xlane.xlu0 %294
        %296 = vadd.xlane.f32.xlu0 %v290
        %v297 = vpop.xlane.xlu0 %296
        %298 = vadd.xlane.f32.xlu0 %v291
        %v299 = vpop.xlane.xlu0 %298
        %v300 = vmul.f32 %v293, 0.00390625
        %v301 = vmul.f32 %v295, 0.00390625
        %v302 = vmul.f32 %v297, 0.00390625
        %v303 = vmul.f32 %v299, 0.00390625
        %v304 = vld [vmem:[#allocation3] sm:$0xff]
        %v305 = vld [vmem:[#allocation3 + $0x8] sm:$0xff]
        %v306 = vld [vmem:[#allocation3 + $0x10] sm:$0xff]
        %v307 = vld [vmem:[#allocation3 + $0x18] sm:$0xff]
        %308 = vmax.xlane.f32.xlu0 %v304
        %v309 = vpop.xlane.xlu0 %308
        %310 = vmax.xlane.f32.xlu0 %v305
        %v311 = vpop.xlane.xlu0 %310
        %312 = vmax.xlane.f32.xlu0 %v306
        %v313 = vpop.xlane.xlu0 %312
        %314 = vmax.xlane.f32.xlu0 %v307
        %v315 = vpop.xlane.xlu0 %314
        %vm316 = vcmask 7168
        %317 = vst.msk [vmem:[%s221] sm:$0xff] %vm316, %v300
        %318 = vst.msk [vmem:[%s221 + $0x8] sm:$0xff] %vm316, %v301
        %319 = vst.msk [vmem:[%s221 + $0x10] sm:$0xff] %vm316, %v302
        %320 = vst.msk [vmem:[%s221 + $0x18] sm:$0xff] %vm316, %v303
        %321 = vst.msk [vmem:[%s231] sm:$0xff] %vm316, %v309
        %322 = vst.msk [vmem:[%s231 + $0x8] sm:$0xff] %vm316, %v311
        %323 = vst.msk [vmem:[%s231 + $0x10] sm:$0xff] %vm316, %v313
        %324 = vst.msk [vmem:[%s231 + $0x18] sm:$0xff] %vm316, %v315
      $region32: #{channel_attention.2} parent=23 // pred_fallthru
        _
      %s325 = smul.u32 4, %s20
      %p326 = scmp.lt.s32.totalorder %s19, 1
      %s327 = scalar_select %p326, %s19, 1
      %p328 = scmp.lt.s32.totalorder %s325, 3
      %s329 = scalar_select %p328, %s325, 3
      %s330 = smul.addr %s327, 4
      %s331 = sadd.s32 %s329, %s330
      %s332 = smul.addr %s331, 8
      %s333 = scalar_lea.vmem %s1, %s332
      %s334 = smul.u32 4, %s20
      %p335 = scmp.lt.s32.totalorder %s19, 1
      %s336 = scalar_select %p335, %s19, 1
      %p337 = scmp.lt.s32.totalorder %s334, 3
      %s338 = scalar_select %p337, %s334, 3
      %s339 = smul.addr %s336, 4
      %s340 = sadd.s32 %s338, %s339
      %s341 = smul.addr %s340, 8
      %s342 = scalar_lea.vmem %s2, %s341
      // Predicated region
      $region33: #{channel_attention.2} parent=23 // pred_check
        %p343 = pneg %p83
      $region34: #{channel_attention.2} parent=23 // pred_check_branch
        %345 = sbr.rel (%p343) target = $region36
      $region35: #{channel_attention.2} parent=23 // pred_region
        %s346 = smul.u32 4, %s20
      $region36: #{channel_attention.2} parent=23 // pred_fallthru
        _
      // Predicated region
      $region37: #{channel_attention.2} parent=23 // pred_check
        %p347 = pneg %p111
      $region38: #{channel_attention.2} parent=23 // pred_check_branch
        %349 = sbr.rel (%p347) target = $region40
      $region39: #{channel_attention.2} parent=23 // pred_region
        %s350 = smul.u32 4, %s20
      $region40: #{channel_attention.2} parent=23 // pred_fallthru
        _
    $region24: #{channel_attention.2} parent=5 // pred_fallthru
      _
    %p351 = scmp.le.s32.totalorder 2, %s9
    // Predicated region
    $region41: #{channel_attention.2} parent=5 // pred_check
      %p352 = pneg %p351
    $region42: #{channel_attention.2} parent=5 // pred_check_branch
      %354 = sbr.rel (%p352) target = $region44
    $region43: #{channel_attention.2} parent=5 // pred_region
      %s355 = ssub.s32 %s9, 2
      // Predicated region
      $region45: #{channel_attention.2} parent=43 // pred_check
        %p356 = pneg %p89
      $region46: #{channel_attention.2} parent=43 // pred_check_branch
        %358 = sbr.rel (%p356) target = $region48
      $region47: #{channel_attention.2} parent=43 // pred_region
        %s359 = smul.u32 4, %s23
        %p360 = scmp.lt.s32.totalorder %s22, 1
        %s361 = scalar_select %p360, %s22, 1
        %p362 = scmp.lt.s32.totalorder %s359, 3
        %s363 = scalar_select %p362, %s359, 3
        %s364 = smul.addr %s361, 4
        %s365 = sadd.s32 %s363, %s364
        %s366 = smul.addr %s365, 8
        %s367 = scalar_lea.vmem %s1, %s366
      $region48: #{channel_attention.2} parent=43 // pred_fallthru
        _
      // Predicated region
      $region49: #{channel_attention.2} parent=43 // pred_check
        %p368 = pneg %p117
      $region50: #{channel_attention.2} parent=43 // pred_check_branch
        %370 = sbr.rel (%p368) target = $region52
      $region51: #{channel_attention.2} parent=43 // pred_region
        %s371 = smul.u32 4, %s23
        %p372 = scmp.lt.s32.totalorder %s22, 1
        %s373 = scalar_select %p372, %s22, 1
        %p374 = scmp.lt.s32.totalorder %s371, 3
        %s375 = scalar_select %p374, %s371, 3
        %s376 = smul.addr %s373, 4
        %s377 = sadd.s32 %s375, %s376
        %s378 = smul.addr %s377, 8
        %s379 = scalar_lea.vmem %s2, %s378
      $region52: #{channel_attention.2} parent=43 // pred_fallthru
        _
    $region44: #{channel_attention.2} parent=5 // pred_fallthru
      _
  $region6: #{channel_attention.2} parent=0 // loop_footer
    %s13 = sadd.s32 1, %s9
  $region7: #{channel_attention.2} parent=0 // loop_footer_branch
    %8 = sbr.rel target = $region3
  $region8: #{channel_attention.2} parent=0 // loop_exit
    _

// kernel: channel_attention.3
$region0: #{channel_attention.3}
  #allocation0 [shape = 'u32[]', space=smem, size = 0x4, offset = 0x4, fixed_abs, tag = 'smem constant byte address 0x4 - core index']
  #allocation1 [shape = 'u32[72,128]{1,0:T(1,128)}', space=vmem, size = 0x9000, scoped, tag = 'internal scratch']
  %s0 = inlined_call_operand.vmem [shape: f32[2,32], index: 0, kind: input, shape index: {}]
  %s1 = inlined_call_operand.vmem [shape: f32[2,32], index: 1, kind: input, shape index: {}]
  %s2 = inlined_call_operand.vmem [shape: f32[32,2], index: 2, kind: input, shape index: {}]
  %s3 = inlined_call_operand.vmem [shape: f32[2,32], index: 3, kind: input, shape index: {}]
  %s4 = inlined_call_operand.hbm [shape: f32[2,32], index: 4, kind: output, shape index: {}]
  %s5 = sld [smem:[#allocation0]]
  $region26: #{channel_attention.3} parent=0
    _
  %s7 = ssub.s32 1, %s5
  %s8 = scalar_select 0, %s7, %s5
  $region1: #{channel_attention.3} parent=0
    #allocation2 [shape = 'u8[1024]{0}', space=vmem, size = 0x400, scoped, tag = 'output window, operand 0, single buffered']
    #allocation3 [shape = 's32[1]{0}', space=sflag, size = 0x4, scoped, tag = 'scoped memory for channel_attention.3']
    %9 = vsyncpa [#allocation3], 0
    // Predicated region
    $region2: #{channel_attention.3} parent=1 // pred_check
      _
    $region3: #{channel_attention.3} parent=1 // pred_check_branch
      %11 = sbr.rel (0) target = $region5
    $region4: #{channel_attention.3} parent=1 // pred_region
      _
    $region5: #{channel_attention.3} parent=1 // pred_fallthru
      _
    // Predicated region
    $region6: #{channel_attention.3} parent=1 // pred_check
      _
    $region7: #{channel_attention.3} parent=1 // pred_check_branch
      %13 = sbr.rel (0) target = $region9
    $region8: #{channel_attention.3} parent=1 // pred_region
      _
    $region9: #{channel_attention.3} parent=1 // pred_fallthru
      _
    // Predicated region
    $region10: #{channel_attention.3} parent=1 // pred_check
      _
    $region11: #{channel_attention.3} parent=1 // pred_check_branch
      %15 = sbr.rel (0) target = $region13
    $region12: #{channel_attention.3} parent=1 // pred_region
      _
    $region13: #{channel_attention.3} parent=1 // pred_fallthru
      _
    // Predicated region
    $region14: #{channel_attention.3} parent=1 // pred_check
      _
    $region15: #{channel_attention.3} parent=1 // pred_check_branch
      %17 = sbr.rel (0) target = $region17
    $region16: #{channel_attention.3} parent=1 // pred_region
      _
    $region17: #{channel_attention.3} parent=1 // pred_fallthru
      _
    %v18 = vld [vmem:[%s2] sm:$0xff]
    %v19 = vld [vmem:[%s2 + $0x8] sm:$0xff]
    %v20 = vld [vmem:[%s2 + $0x10] sm:$0xff]
    %v21 = vld [vmem:[%s2 + $0x18] sm:$0xff]
    %v22 = vld [vmem:[%s0] sm:$0x3]
    %vm23 = vcmask 261120
    %v25 = vsel %vm23, %v22, 0
    %27 = vmatpush.msra.mxu0 0.0
    %28 = vmatpush.msra.mxu0 0.0
    %29 = vmatpush.msra.mxu0 0.0
    %30 = vmatpush.msra.mxu0 0.0
    %31 = vmatpush.msra.mxu0 0.0
    %32 = vmatpush.msra.mxu0 0.0
    %33 = vmatpush.msra.mxu0 0.0
    %34 = vmatpush.msra.mxu0 0.0
    %35 = vmatpush.msra.mxu0 0.0
    %36 = vmatpush.msra.mxu0 0.0
    %37 = vmatpush.msra.mxu0 0.0
    %38 = vmatpush.msra.mxu0 0.0
    %39 = vmatpush.msra.mxu0 %v21
    %40 = vmatpush.msra.mxu0 %v20
    %41 = vmatpush.msra.mxu0 %v19
    %42 = vmatpush.msra.mxu0 %v18
    %43 = vmatmul.f32.gmra.mxu0 %v25
    %v44 = vpop.f32.mrf.mxu0
    %v45 = vadd.f32 0.0, %v44
    %46 = vdwg.mxu0
    %v47 = vmax.f32 %v45, 0.0
    %v48 = vld [vmem:[%s1] sm:$0x3]
    %v50 = vsel %vm23, %v48, 0
    %52 = vmatpush.msra.mxu0 0.0
    %53 = vmatpush.msra.mxu0 0.0
    %54 = vmatpush.msra.mxu0 0.0
    %55 = vmatpush.msra.mxu0 0.0
    %56 = vmatpush.msra.mxu0 0.0
    %57 = vmatpush.msra.mxu0 0.0
    %58 = vmatpush.msra.mxu0 0.0
    %59 = vmatpush.msra.mxu0 0.0
    %60 = vmatpush.msra.mxu0 0.0
    %61 = vmatpush.msra.mxu0 0.0
    %62 = vmatpush.msra.mxu0 0.0
    %63 = vmatpush.msra.mxu0 0.0
    %64 = vmatpush.msra.mxu0 %v21
    %65 = vmatpush.msra.mxu0 %v20
    %66 = vmatpush.msra.mxu0 %v19
    %67 = vmatpush.msra.mxu0 %v18
    %68 = vmatmul.f32.gmra.mxu0 %v50
    %v69 = vpop.f32.mrf.mxu0
    %v70 = vadd.f32 0.0, %v69
    %71 = vdwg.mxu0
    %v72 = vmax.f32 %v70, 0.0
    %v73 = vadd.f32 %v47, %v72
    %v74 = vld [vmem:[%s3] sm:$0x3]
    %vm75 = vcmask 15360
    %v77 = vsel %vm75, %v73, 0
    %vm79 = vcmask 1041408
    %v81 = vsel %vm79, %v74, 0
    %83 = vmatpush.msra.mxu0 0.0
    %84 = vmatpush.msra.mxu0 0.0
    %85 = vmatpush.msra.mxu0 0.0
    %86 = vmatpush.msra.mxu0 0.0
    %87 = vmatpush.msra.mxu0 0.0
    %88 = vmatpush.msra.mxu0 0.0
    %89 = vmatpush.msra.mxu0 0.0
    %90 = vmatpush.msra.mxu0 0.0
    %91 = vmatpush.msra.mxu0 0.0
    %92 = vmatpush.msra.mxu0 0.0
    %93 = vmatpush.msra.mxu0 0.0
    %94 = vmatpush.msra.mxu0 0.0
    %95 = vmatpush.msra.mxu0 0.0
    %96 = vmatpush.msra.mxu0 0.0
    %97 = vmatpush.msra.mxu0 0.0
    %98 = vmatpush.msra.mxu0 %v81
    %99 = vmatmul.f32.gmra.mxu0 %v77
    %v100 = vpop.f32.mrf.mxu0
    %v101 = vadd.f32 0.0, %v100
    %102 = vdwg.mxu0
    %v103 = vxor.u32 %v101, 2147483648
    %v104 = vmul.f32 %v103, 1.442695
    %v105 = vpow.pop %v104
    %v106 = vadd.f32 %v105, 1.0
    %v107 = vrcp.pop %v106
    %v108 = vmul.f32 %v106, %v107
    %v109 = vsub.f32 1.0, %v108
    %v110 = vmul.f32 %v107, %v109
    %v111 = vadd.f32 %v107, %v110
    %vm112 = vweird.f32 %v106
    %vm113 = vweird.f32 %v107
    %vm114 = vmor %vm112, %vm113
    %v115 = vsel %vm114, %v107, %v111
    %v116 = vand.u32 2147483647, %v106
    %vm117 = vcmp.eq.f32.partialorder %v116, 8.507059e+37
    %v118 = vand.u32 %v106, 2147483648
    %v119 = vor.u32 1.1754944e-38, %v118
    %v120 = vsel %vm117, %v119, %v115
    %v121 = vmul.f32 1.0, %v120
    %vm122 = vcmask 254976
    %123 = vst.msk [vmem:[#allocation2] sm:$0x3] %vm122, %v121
    // Predicated region
    $region18: #{channel_attention.3} parent=1 // pred_check
      _
    $region19: #{channel_attention.3} parent=1 // pred_check_branch
      %125 = sbr.rel (0) target = $region21
    $region20: #{channel_attention.3} parent=1 // pred_region
      %127 = vsyncadd [#allocation3], 0
      %s129 = sshll.u32 [#allocation2], 4
      %s130 = int_to_ptr.vmem [resolvable:$true] %s129
      %s131 = sshll.u32 %s4, 4
      %s132 = int_to_ptr.hbm [resolvable:$true] %s131
      %134 = dma.vmem_to_hbm [thread:$0]  %s130, 32, %s132, [#allocation3]
    $region21: #{channel_attention.3} parent=1 // pred_fallthru
      _
    // Predicated region
    $region22: #{channel_attention.3} parent=1 // pred_check
      _
    $region23: #{channel_attention.3} parent=1 // pred_check_branch
      %136 = sbr.rel (0) target = $region25
    $region24: #{channel_attention.3} parent=1 // pred_region
      %138 = dma.done [#allocation3], 32
    $region25: #{channel_attention.3} parent=1 // pred_fallthru
      _
    %139 = vsyncpa [#allocation3], 1

</llo_original>
